<compile_context>
chip_gen: v6e
topology: v6e:2x2x1
jax: 0.10.0
libtpu: 0.0.40
codegen_flags: <defaults>
</compile_context>

<pallas_src>
import functools

import jax
import jax.numpy as jnp
from jax import lax
from jax.experimental import pallas as pl
from jax.experimental.pallas import tpu as pltpu


def _token_seg_head_kernel(tokens_ref, cls_ref, out_ref, *, temperature,
                           use_softmax):
    # tokens_ref: (TN, C) native dtype; cls_ref: (n_cls, C); out_ref: (TN, n_cls)
    logits = lax.dot_general(
        tokens_ref[...], cls_ref[...],
        dimension_numbers=(((1,), (1,)), ((), ())),   # contract C with C
        preferred_element_type=jnp.float32,
    )
    logits = logits * jnp.float32(temperature)

    if use_softmax:
        m = jnp.max(logits, axis=-1, keepdims=True)
        e = jnp.exp(logits - m)
        denom = jnp.sum(e, axis=-1, keepdims=True)
        probs = e * pl.reciprocal(denom, approx=True)          # divide -> EUP
    else:
        probs = pl.reciprocal(1.0 + jnp.exp(-logits), approx=True)

    out_ref[...] = probs.astype(out_ref.dtype)


def _choose_token_tile(N, C, itemsize, *, max_tile=1024, budget_bytes=4 << 20):
    """Token-axis tile: a multiple of 8 sized so one (TN, C) buffer fits in
    `budget_bytes` (Pallas double-buffers it), capped at `max_tile`."""
    per_row = max(1, C * itemsize)
    tn = (budget_bytes // per_row) // 8 * 8
    tn = max(8, min(tn, max_tile))
    if N <= tn:
        return N  # the full axis is always a legal block extent
    return tn


def token_seg_head(tokens, cls_tokens, *, use_softmax=False, temperature=1.0,
                   num_classes=2, tile_n=None):
    """Pallas implementation of TokenSegHead.forward.

    tokens:     (B, N, C)
    cls_tokens: (B, n_cls, C)
    returns:    (B, N, n_cls)
    """
    B, N, C = tokens.shape
    Bc, n_cls, Cc = cls_tokens.shape
    assert B == Bc and C == Cc

    # Same assertions as the PyTorch module.
    if use_softmax:
        assert n_cls == num_classes
    else:
        assert n_cls == num_classes - 1

    if tile_n is None:
        tile_n = _choose_token_tile(N, C, tokens.dtype.itemsize)
    tile_n = min(tile_n, N)
    n_tiles = pl.cdiv(N, tile_n)

    kernel = functools.partial(_token_seg_head_kernel,
                               temperature=temperature,
                               use_softmax=use_softmax)

    return pl.pallas_call(
        kernel,
        out_shape=jax.ShapeDtypeStruct((B, N, n_cls), tokens.dtype),
        grid_spec=pltpu.PrefetchScalarGridSpec(
            num_scalar_prefetch=0,
            grid=(B, n_tiles),
            in_specs=[
                # tokens: streamed (TN, C) tiles, auto double-buffered.
                pl.BlockSpec((None, tile_n, C), lambda b, n: (b, n, 0)),
                # cls tokens: indexed only by b -> resident across all N tiles.
                pl.BlockSpec((None, n_cls, C), lambda b, n: (b, 0, 0)),
            ],
            out_specs=pl.BlockSpec((None, tile_n, n_cls),
                                   lambda b, n: (b, n, 0)),
        ),
        compiler_params=pltpu.CompilerParams(
            # Both axes independent -> shard across v7x's two TensorCores.
            dimension_semantics=("parallel", "parallel"),
            # Lift v5e's 16 MiB default scoped VMEM; safe on all generations.
            vmem_limit_bytes=32 * 1024 * 1024,
        ),
    )(tokens, cls_tokens)


def _reference(tokens, cls_tokens, *, use_softmax, temperature):
    logits = jnp.einsum('bik,bjk->bij', tokens.astype(jnp.float32),
                        cls_tokens.astype(jnp.float32)) * temperature
    if use_softmax:
        return jax.nn.softmax(logits, axis=-1).astype(tokens.dtype)
    return jax.nn.sigmoid(logits).astype(tokens.dtype)


if __name__ == "__main__":
    key = jax.random.PRNGKey(0)
    k1, k2, k3, k4, k5, k6 = jax.random.split(key, 6)

    temperature = 0.5
    # Tolerances account for the approx (EUP) reciprocal in the epilogue.
    ATOL, RTOL = 2e-3, 2e-3
    ok = True

    # Case 1: softmax head, n_cls = num_classes = 2.
    B, N, C, n_cls = 2, 16, 32, 2
    tokens = jax.random.normal(k1, (B, N, C), dtype=jnp.float32)
    cls_tokens = jax.random.normal(k2, (B, n_cls, C), dtype=jnp.float32)
    out = jax.block_until_ready(
        token_seg_head(tokens, cls_tokens, use_softmax=True,
                       temperature=temperature, num_classes=2))
    ref = _reference(tokens, cls_tokens, use_softmax=True,
                     temperature=temperature)
    ok &= bool(jnp.allclose(out, ref, atol=ATOL, rtol=RTOL))

    # Case 2: sigmoid head, num_classes = 2 -> n_cls = 1.
    n_cls = 1
    tokens2 = jax.random.normal(k3, (B, N, C), dtype=jnp.float32)
    cls_tokens2 = jax.random.normal(k4, (B, n_cls, C), dtype=jnp.float32)
    out2 = jax.block_until_ready(
        token_seg_head(tokens2, cls_tokens2, use_softmax=False,
                       temperature=temperature, num_classes=2))
    ref2 = _reference(tokens2, cls_tokens2, use_softmax=False,
                      temperature=temperature)
    ok &= bool(jnp.allclose(out2, ref2, atol=ATOL, rtol=RTOL))

    # Case 3: exercise the tiled-N path (multiple tiles + partial last tile).
    B3, N3, C3, ncls3 = 2, 40, 32, 2
    tokens3 = jax.random.normal(k5, (B3, N3, C3), dtype=jnp.float32)
    cls_tokens3 = jax.random.normal(k6, (B3, ncls3, C3), dtype=jnp.float32)
    out3 = jax.block_until_ready(
        token_seg_head(tokens3, cls_tokens3, use_softmax=True,
                       temperature=temperature, num_classes=2, tile_n=16))
    ref3 = _reference(tokens3, cls_tokens3, use_softmax=True,
                      temperature=temperature)
    ok &= bool(jnp.allclose(out3, ref3, atol=ATOL, rtol=RTOL))

    if ok:
        print("KERNEL_OK")
    else:
        print("MISMATCH")
</pallas_src>

<mosaic_0001>
module attributes {stable_mosaic.version = 11 : i64} {
  func.func @_token_seg_head_kernel(%arg0: i32, %arg1: i32, %arg2: memref<1x16x32xf32, #tpu.memory_space<vmem>>, %arg3: memref<1x2x32xf32, #tpu.memory_space<vmem>>, %arg4: memref<1x16x2xf32, #tpu.memory_space<vmem>>) attributes {dimension_semantics = [#tpu.dimension_semantics<parallel>, #tpu.dimension_semantics<parallel>], iteration_bounds = array<i64: 2, 1>, scalar_prefetch = 0 : i64, scratch_operands = 0 : i64, tpu.core_type = #tpu.core_type<tc>, window_params = [{transform_indices = @transform_0, window_bounds = array<i64: 1, 16, 32>}, {transform_indices = @transform_1, window_bounds = array<i64: 1, 2, 32>}, {transform_indices = @transform_2, window_bounds = array<i64: 1, 16, 2>}]} {
    %c0 = arith.constant 0 : index
    %c0_0 = arith.constant 0 : index
    %c0_1 = arith.constant 0 : index
    %0 = vector.load %arg2[%c0, %c0_0, %c0_1] : memref<1x16x32xf32, #tpu.memory_space<vmem>>, vector<1x16x32xf32>
    %1 = vector.shape_cast %0 : vector<1x16x32xf32> to vector<16x32xf32>
    %c0_2 = arith.constant 0 : index
    %c0_3 = arith.constant 0 : index
    %c0_4 = arith.constant 0 : index
    %2 = vector.load %arg3[%c0_2, %c0_3, %c0_4] : memref<1x2x32xf32, #tpu.memory_space<vmem>>, vector<1x2x32xf32>
    %3 = vector.shape_cast %2 : vector<1x2x32xf32> to vector<2x32xf32>
    %cst = arith.constant dense<0.000000e+00> : vector<16x2xf32>
    %4 = tpu.matmul %1, %3, %cst {dimension_numbers = #tpu.dot_dimension_numbers<[1], [1], [0], [0], [0, 0, 1, 0], [], []>} : vector<16x32xf32>, vector<2x32xf32>, vector<16x2xf32> -> vector<16x2xf32>
    %cst_5 = arith.constant 5.000000e-01 : f32
    %5 = vector.broadcast %cst_5 : f32 to vector<16x2xf32>
    %6 = arith.mulf %4, %5 : vector<16x2xf32>
    %cst_6 = arith.constant dense<0xFF800000> : vector<16xf32>
    %7 = vector.multi_reduction <maximumf>, %6, %cst_6 [1] : vector<16x2xf32> to vector<16xf32>
    %8 = vector.shape_cast %7 : vector<16xf32> to vector<16x1xf32>
    %9 = vector.broadcast %8 : vector<16x1xf32> to vector<16x2xf32>
    %10 = arith.subf %6, %9 : vector<16x2xf32>
    %11 = math.exp %10 : vector<16x2xf32>
    %cst_7 = arith.constant dense<0.000000e+00> : vector<16xf32>
    %12 = vector.multi_reduction <add>, %11, %cst_7 [1] : vector<16x2xf32> to vector<16xf32>
    %13 = vector.shape_cast %12 : vector<16xf32> to vector<16x1xf32>
    %14 = tpu.reciprocal %13 {approx = true} : vector<16x1xf32> -> vector<16x1xf32>
    %15 = vector.broadcast %14 : vector<16x1xf32> to vector<16x2xf32>
    %16 = arith.mulf %11, %15 : vector<16x2xf32>
    %c0_8 = arith.constant 0 : index
    %c0_9 = arith.constant 0 : index
    %c0_10 = arith.constant 0 : index
    %17 = vector.load %arg4[%c0_8, %c0_9, %c0_10] : memref<1x16x2xf32, #tpu.memory_space<vmem>>, vector<1x16x2xf32>
    %18 = vector.shape_cast %17 : vector<1x16x2xf32> to vector<16x2xf32>
    %19 = vector.shape_cast %16 : vector<16x2xf32> to vector<1x16x2xf32>
    tpu.vector_store %arg4[%c0_8, %c0_9, %c0_10], %19 {strides = array<i32>} : memref<1x16x2xf32, #tpu.memory_space<vmem>>, vector<1x16x2xf32>,
    return
  }
  func.func @transform_0(%arg0: i32, %arg1: i32) -> (i32, i32, i32) {
    %c0_i32 = arith.constant 0 : i32
    %c0_i32_0 = arith.constant 0 : i32
    return %arg0, %arg1, %c0_i32 : i32, i32, i32
  }
  func.func @transform_1(%arg0: i32, %arg1: i32) -> (i32, i32, i32) {
    %c0_i32 = arith.constant 0 : i32
    %c0_i32_0 = arith.constant 0 : i32
    %c0_i32_1 = arith.constant 0 : i32
    return %arg0, %c0_i32, %c0_i32_0 : i32, i32, i32
  }
  func.func @transform_2(%arg0: i32, %arg1: i32) -> (i32, i32, i32) {
    %c0_i32 = arith.constant 0 : i32
    %c0_i32_0 = arith.constant 0 : i32
    return %arg0, %arg1, %c0_i32 : i32, i32, i32
  }
}

</mosaic_0001>

<llo_original>
// kernel: tpu_custom_call.1
$region0: #{tpu_custom_call.1}
  #allocation0 [shape = 'u32[]', space=smem, size = 0x4, offset = 0x4, fixed_abs, tag = 'smem constant byte address 0x4 - core index']
  #allocation1 [shape = 'u32[144,128]{1,0:T(1,128)}', space=vmem, size = 0x12000, scoped, tag = 'internal scratch']
  %s0 = inlined_call_operand.hbm [shape: f32[2,16,32], index: 0, kind: input, shape index: {}]
  %s1 = inlined_call_operand.hbm [shape: f32[2,2,32], index: 1, kind: input, shape index: {}]
  %s2 = inlined_call_operand.vmem [shape: f32[2,16,2], index: 2, kind: output, shape index: {}]
  %s3 = sld [smem:[#allocation0]]
  $region49: #{tpu_custom_call.1} parent=0
    _
  %s5 = ssub.s32 1, %s3
  %s6 = scalar_select 0, %s5, %s3
  $region1: #{tpu_custom_call.1} parent=0
    #allocation2 [shape = 'u8[16384]{0}', space=vmem, size = 0x4000, scoped, tag = 'input window, operand 0']
    #allocation3 [shape = 's32[2]{0}', space=sflag, size = 0x8, scoped, tag = 'scoped memory for tpu_custom_call.1']
    #allocation4 [shape = 'u8[2048]{0}', space=vmem, size = 0x800, scoped, tag = 'input window, operand 1']
    #allocation5 [shape = 's32[2]{0}', space=sflag, size = 0x8, scoped, tag = 'scoped memory for tpu_custom_call.1']
    %7 = vsyncpa [#allocation3], 0
    %s8 = scalar_lea.sflag [#allocation3], 1
    %9 = vsyncpa %s8, 0
    %10 = vsyncpa [#allocation5], 0
    %s11 = scalar_lea.sflag [#allocation5], 1
    %12 = vsyncpa %s11, 0
    loop: start=0, step=1, limit=4
    $region2: #{tpu_custom_call.1} parent=1 // loop_pre_header
      _
    $region3: #{tpu_custom_call.1} parent=1 // loop_header
      %s14 = sphi 0, %s18
      %p15 = scmp.ge.s32.totalorder %s14, 4
      %s21 = sphi 0, %s33
      %s22 = sphi 0, %s29
      %s23 = sphi 0, %s21
      %s24 = sphi 0, %s22
      %s25 = sphi 0, %s23
      %s26 = sphi 0, %s24
      %s38 = sphi 0, %s40
      %s41 = sphi 0, %s38
      %s42 = sphi 0, %s41
      %s58 = sphi 0, %s42
      %s64 = sphi 0, %s66
      %s67 = sphi 0, %s64
      %s68 = sphi 0, %s67
      %s84 = sphi 0, %s68
      %s92 = sphi 0, %s94
      %s95 = sphi 0, %s92
      %s96 = sphi 0, %s95
      %s112 = sphi 0, %s96
    $region4: #{tpu_custom_call.1} parent=1 // loop_header_branch
      %17 = sbr.rel (%p15) target = $region8
    $region5: #{tpu_custom_call.1} parent=1 // loop_body
      %s19 = ssub.s32 %s14, 1
      %s20 = ssub.s32 %s14, 2
      %s27 = sadd.s32 1, %s22
      %p28 = scmp.ge.s32.totalorder %s27, 1
      %s29 = scalar_select %p28, 0, %s27
      %s30 = sadd.s32 1, %s21
      %s31 = scalar_select %p28, %s30, %s21
      %p32 = scmp.ge.s32.totalorder %s31, 2
      %s33 = scalar_select %p32, 0, %s31
      %s34 = ssub.s32 %s21, %s33
      %s35 = ssub.s32 %s22, %s29
      %s36 = sor.u32 %s34, %s35
      %p37 = scmp.eq.s32.totalorder %s36, 0
      %s39 = sadd.s32 %s38, 1
      %s40 = scalar_select %p37, %s38, %s39
      %p43 = pneg %p37
      %p44 = scmp.eq.s32.totalorder %s14, 1
      %p45 = por %p43, %p44
      %p46 = scmp.ne.s32.totalorder %s38, %s41
      %p47 = scmp.eq.s32.totalorder %s14, 0
      %p48 = por %p46, %p47
      %p49 = scmp.ne.s32.totalorder %s38, %s41
      %p50 = scmp.eq.s32.totalorder %s19, 1
      %p51 = por %p49, %p50
      %p52 = scmp.ne.s32.totalorder %s41, %s42
      %p53 = scmp.eq.s32.totalorder %s19, 0
      %p54 = por %p52, %p53
      %p55 = scmp.ne.s32.totalorder %s41, %s42
      %p56 = scmp.eq.s32.totalorder %s20, 1
      %p57 = por %p55, %p56
      %p59 = scmp.ne.s32.totalorder %s42, %s58
      %p60 = scmp.eq.s32.totalorder %s20, 0
      %p61 = por %p59, %p60
      %s62 = ssub.s32 %s21, %s33
      %p63 = scmp.eq.s32.totalorder %s62, 0
      %s65 = sadd.s32 %s64, 1
      %s66 = scalar_select %p63, %s64, %s65
      %p69 = pneg %p63
      %p70 = scmp.eq.s32.totalorder %s14, 1
      %p71 = por %p69, %p70
      %p72 = scmp.ne.s32.totalorder %s64, %s67
      %p73 = scmp.eq.s32.totalorder %s14, 0
      %p74 = por %p72, %p73
      %p75 = scmp.ne.s32.totalorder %s64, %s67
      %p76 = scmp.eq.s32.totalorder %s19, 1
      %p77 = por %p75, %p76
      %p78 = scmp.ne.s32.totalorder %s67, %s68
      %p79 = scmp.eq.s32.totalorder %s19, 0
      %p80 = por %p78, %p79
      %p81 = scmp.ne.s32.totalorder %s67, %s68
      %p82 = scmp.eq.s32.totalorder %s20, 1
      %p83 = por %p81, %p82
      %p85 = scmp.ne.s32.totalorder %s68, %s84
      %p86 = scmp.eq.s32.totalorder %s20, 0
      %p87 = por %p85, %p86
      %s88 = ssub.s32 %s21, %s33
      %s89 = ssub.s32 %s22, %s29
      %s90 = sor.u32 %s88, %s89
      %p91 = scmp.eq.s32.totalorder %s90, 0
      %s93 = sadd.s32 %s92, 1
      %s94 = scalar_select %p91, %s92, %s93
      %p97 = pneg %p91
      %p98 = scmp.eq.s32.totalorder %s14, 1
      %p99 = por %p97, %p98
      %p100 = scmp.ne.s32.totalorder %s92, %s95
      %p101 = scmp.eq.s32.totalorder %s14, 0
      %p102 = por %p100, %p101
      %p103 = scmp.ne.s32.totalorder %s92, %s95
      %p104 = scmp.eq.s32.totalorder %s19, 1
      %p105 = por %p103, %p104
      %p106 = scmp.ne.s32.totalorder %s95, %s96
      %p107 = scmp.eq.s32.totalorder %s19, 0
      %p108 = por %p106, %p107
      %p109 = scmp.ne.s32.totalorder %s95, %s96
      %p110 = scmp.eq.s32.totalorder %s20, 1
      %p111 = por %p109, %p110
      %p113 = scmp.ne.s32.totalorder %s96, %s112
      %p114 = scmp.eq.s32.totalorder %s20, 0
      %p115 = por %p113, %p114
      %p116 = scmp.le.s32.totalorder 1, %s14
      %p117 = scmp.lt.s32.totalorder %s14, 3
      %p118 = pnand %p116, %p117
      %p119 = pneg %p118
      // Predicated region
      $region9: #{tpu_custom_call.1} parent=5 // pred_check
        _
      $region10: #{tpu_custom_call.1} parent=5 // pred_check_branch
        %121 = sbr.rel (%p118) target = $region12
      $region11: #{tpu_custom_call.1} parent=5 // pred_region
        %s122 = ssub.s32 %s14, 1
      $region12: #{tpu_custom_call.1} parent=5 // pred_fallthru
        _
      %p123 = scmp.lt.s32.totalorder %s14, 2
      // Predicated region
      $region13: #{tpu_custom_call.1} parent=5 // pred_check
        %p124 = pneg %p123
      $region14: #{tpu_custom_call.1} parent=5 // pred_check_branch
        %126 = sbr.rel (%p124) target = $region16
      $region15: #{tpu_custom_call.1} parent=5 // pred_region
        // Predicated region
        $region17: #{tpu_custom_call.1} parent=15 // pred_check
          %p127 = pneg %p48
        $region18: #{tpu_custom_call.1} parent=15 // pred_check_branch
          %129 = sbr.rel (%p127) target = $region20
        $region19: #{tpu_custom_call.1} parent=15 // pred_region
          %s130 = sand.u32 %s38, 1
          %s131 = scalar_lea.sflag [#allocation3], %s130
          %s132 = sand.u32 %s38, 1
          %s133 = smul.addr %s132, 16
          %s134 = scalar_lea.vmem [#allocation2], %s133
          %s135 = smul.u32 2, %s22
          %s137 = ssub.s32 256, 256
          %138 = vsyncadd %s131, %s137
          %s139 = smul.addr %s21, 2
          %s140 = sadd.s32 %s135, %s139
          %s141 = smul.addr %s140, 128
          %s142 = scalar_lea.hbm %s0, %s141
          %s143 = sshll.u32 %s134, 4
          %s144 = int_to_ptr.vmem [resolvable:$true] %s143
          %149 = dma.hbm_to_vmem [thread:$0]  %s142, 256, %s144, %s131, 128, 128, 8
        $region20: #{tpu_custom_call.1} parent=15 // pred_fallthru
          _
        // Predicated region
        $region21: #{tpu_custom_call.1} parent=15 // pred_check
          %p150 = pneg %p74
        $region22: #{tpu_custom_call.1} parent=15 // pred_check_branch
          %152 = sbr.rel (%p150) target = $region24
        $region23: #{tpu_custom_call.1} parent=15 // pred_region
          %s153 = sand.u32 %s64, 1
          %s154 = scalar_lea.sflag [#allocation5], %s153
          %s155 = sand.u32 %s64, 1
          %s156 = smul.addr %s155, 2
          %s157 = scalar_lea.vmem [#allocation4], %s156
          %s159 = ssub.s32 32, 32
          %160 = vsyncadd %s154, %s159
          %s161 = smul.addr %s21, 32
          %s162 = scalar_lea.hbm %s1, %s161
          %s164 = sshll.u32 %s157, 4
          %s165 = int_to_ptr.vmem [resolvable:$true] %s164
          %167 = dma.hbm_to_vmem [thread:$0]  %s162, 32, %s165, %s154
        $region24: #{tpu_custom_call.1} parent=15 // pred_fallthru
          _
      $region16: #{tpu_custom_call.1} parent=5 // pred_fallthru
        _
      %p168 = scmp.le.s32.totalorder 1, %s14
      %p169 = scmp.lt.s32.totalorder %s14, 3
      %p170 = pnand %p168, %p169
      %p171 = pneg %p170
      // Predicated region
      $region25: #{tpu_custom_call.1} parent=5 // pred_check
        _
      $region26: #{tpu_custom_call.1} parent=5 // pred_check_branch
        %173 = sbr.rel (%p170) target = $region28
      $region27: #{tpu_custom_call.1} parent=5 // pred_region
        %s174 = ssub.s32 %s14, 1
        %s175 = sand.u32 %s41, 1
        %s176 = scalar_lea.sflag [#allocation3], %s175
        %s177 = sand.u32 %s41, 1
        %s178 = smul.addr %s177, 16
        %s179 = scalar_lea.vmem [#allocation2], %s178
        // Predicated region
        $region29: #{tpu_custom_call.1} parent=27 // pred_check
          %p180 = pneg %p54
        $region30: #{tpu_custom_call.1} parent=27 // pred_check_branch
          %182 = sbr.rel (%p180) target = $region32
        $region31: #{tpu_custom_call.1} parent=27 // pred_region
          %183 = dma.done %s176, 256
        $region32: #{tpu_custom_call.1} parent=27 // pred_fallthru
          _
        %s184 = sand.u32 %s67, 1
        %s185 = scalar_lea.sflag [#allocation5], %s184
        %s186 = sand.u32 %s67, 1
        %s187 = smul.addr %s186, 2
        %s188 = scalar_lea.vmem [#allocation4], %s187
        // Predicated region
        $region33: #{tpu_custom_call.1} parent=27 // pred_check
          %p189 = pneg %p80
        $region34: #{tpu_custom_call.1} parent=27 // pred_check_branch
          %191 = sbr.rel (%p189) target = $region36
        $region35: #{tpu_custom_call.1} parent=27 // pred_region
          %192 = dma.done %s185, 32
        $region36: #{tpu_custom_call.1} parent=27 // pred_fallthru
          _
        %s193 = sand.u32 %s41, 1
        %s194 = scalar_lea.sflag [#allocation3], %s193
        %s195 = sand.u32 %s41, 1
        %s196 = smul.addr %s195, 16
        %s197 = scalar_lea.vmem [#allocation2], %s196
        %p198 = pneg %p54
        %p199 = pneg %p51
        %s200 = sand.u32 %s67, 1
        %s201 = scalar_lea.sflag [#allocation5], %s200
        %s202 = sand.u32 %s67, 1
        %s203 = smul.addr %s202, 2
        %s204 = scalar_lea.vmem [#allocation4], %s203
        %p205 = pneg %p80
        %p206 = pneg %p77
        %p207 = pneg %p108
        %p208 = pneg %p105
        %s209 = smul.u32 2, %s24
        %p210 = scmp.lt.s32.totalorder %s23, 1
        %s211 = scalar_select %p210, %s23, 1
        %p212 = scmp.lt.s32.totalorder %s209, 1
        %s213 = scalar_select %p212, %s209, 1
        %s214 = smul.addr %s211, 2
        %s215 = sadd.s32 %s213, %s214
        %s216 = smul.addr %s215, 8
        %s217 = scalar_lea.vmem %s2, %s216
        %s218 = smul.u32 2, %s24
        %s219 = smul.u32 2, %s24
        %p220 = scmp.lt.s32.totalorder %s23, 1
        %s221 = scalar_select %p220, %s23, 1
        %p222 = scmp.lt.s32.totalorder %s219, 1
        %s223 = scalar_select %p222, %s219, 1
        %s224 = smul.addr %s221, 2
        %s225 = sadd.s32 %s223, %s224
        %s226 = smul.addr %s225, 8
        %s227 = scalar_lea.vmem %s2, %s226
        %s228 = smul.u32 2, %s24
        %v229 = vld [vmem:[%s179] sm:$0xff]
        %v230 = vld [vmem:[%s179 + $0x8] sm:$0xff]
        %v231 = vld [vmem:[%s188] sm:$0x3]
        %vm232 = vcmask 261120
        %v234 = vsel %vm232, %v229, 0
        %v237 = vsel %vm232, %v230, 0
        %v240 = vsel %vm232, %v231, 0
        %242 = vmatprep.subr.mxu0 0.0
        %243 = vmatpush1.xpose.msra.mxu0 0.0
        %244 = vmatprep.subr.mxu0 0.0
        %245 = vmatpush1.xpose.msra.mxu0 0.0
        %246 = vmatprep.subr.mxu0 0.0
        %247 = vmatpush1.xpose.msra.mxu0 0.0
        %248 = vmatprep.subr.mxu0 0.0
        %249 = vmatpush1.xpose.msra.mxu0 0.0
        %250 = vmatprep.subr.mxu0 0.0
        %251 = vmatpush1.xpose.msra.mxu0 0.0
        %252 = vmatprep.subr.mxu0 0.0
        %253 = vmatpush1.xpose.msra.mxu0 0.0
        %254 = vmatprep.subr.mxu0 0.0
        %255 = vmatpush1.xpose.msra.mxu0 0.0
        %256 = vmatprep.subr.mxu0 0.0
        %257 = vmatpush1.xpose.msra.mxu0 0.0
        %258 = vmatprep.subr.mxu0 0.0
        %259 = vmatpush1.xpose.msra.mxu0 0.0
        %260 = vmatprep.subr.mxu0 0.0
        %261 = vmatpush1.xpose.msra.mxu0 0.0
        %262 = vmatprep.subr.mxu0 0.0
        %263 = vmatpush1.xpose.msra.mxu0 0.0
        %264 = vmatprep.subr.mxu0 0.0
        %265 = vmatpush1.xpose.msra.mxu0 0.0
        %266 = vmatprep.subr.mxu0 0.0
        %267 = vmatpush1.xpose.msra.mxu0 0.0
        %268 = vmatprep.subr.mxu0 0.0
        %269 = vmatpush1.xpose.msra.mxu0 0.0
        %270 = vmatprep.subr.mxu0 0.0
        %271 = vmatpush1.xpose.msra.mxu0 0.0
        %272 = vmatprep.subr.mxu0 0.0
        %273 = vmatpush1.xpose.msra.mxu0 %v240
        %274 = vmatprep.subr.mxu0 0.0
        %275 = vmatpush2.xpose.msra.mxu0 0.0
        %276 = vmatprep.subr.mxu0 0.0
        %277 = vmatpush2.xpose.msra.mxu0 0.0
        %278 = vmatprep.subr.mxu0 0.0
        %279 = vmatpush2.xpose.msra.mxu0 0.0
        %280 = vmatprep.subr.mxu0 0.0
        %281 = vmatpush2.xpose.msra.mxu0 0.0
        %282 = vmatprep.subr.mxu0 0.0
        %283 = vmatpush2.xpose.msra.mxu0 0.0
        %284 = vmatprep.subr.mxu0 0.0
        %285 = vmatpush2.xpose.msra.mxu0 0.0
        %286 = vmatprep.subr.mxu0 0.0
        %287 = vmatpush2.xpose.msra.mxu0 0.0
        %288 = vmatprep.subr.mxu0 0.0
        %289 = vmatpush2.xpose.msra.mxu0 0.0
        %290 = vmatprep.subr.mxu0 0.0
        %291 = vmatpush2.xpose.msra.mxu0 0.0
        %292 = vmatprep.subr.mxu0 0.0
        %293 = vmatpush2.xpose.msra.mxu0 0.0
        %294 = vmatprep.subr.mxu0 0.0
        %295 = vmatpush2.xpose.msra.mxu0 0.0
        %296 = vmatprep.subr.mxu0 0.0
        %297 = vmatpush2.xpose.msra.mxu0 0.0
        %298 = vmatprep.subr.mxu0 0.0
        %299 = vmatpush2.xpose.msra.mxu0 0.0
        %300 = vmatprep.subr.mxu0 0.0
        %301 = vmatpush2.xpose.msra.mxu0 0.0
        %302 = vmatprep.subr.mxu0 0.0
        %303 = vmatpush2.xpose.msra.mxu0 0.0
        %304 = vmatprep.subr.mxu0 0.0
        %305 = vmatpush2.xpose.msra.mxu0 0.0
        %306 = vmatprep.mubr.f32.mxu0 0.0
        %307 = vmatmul.mubr.f32.gmra.mxu0 %v234
        %v308 = vpop.f32.mrf.mxu0
        %v309 = vadd.f32 0.0, %v308
        %v310 = vpop.f32.mrf.mxu0
        %311 = vmatprep.mubr.f32.mxu0 0.0
        %312 = vmatmul.mubr.f32.gmra.mxu0 %v237
        %v313 = vpop.f32.mrf.mxu0
        %v314 = vadd.f32 0.0, %v313
        %v315 = vpop.f32.mrf.mxu0
        %316 = vdwg.mxu0
        %v317 = vmul.f32 %v309, 0.5
        %v318 = vmul.f32 %v314, 0.5
        %vm319 = vcmask 15360
        %v320 = vsel %vm319, %v317, -inf
        %321 = vmax.xlane.f32.xlu0 %v320
        %v322 = vpop.xlane.xlu0 %321
        %v323 = vsel %vm319, %v318, -inf
        %324 = vmax.xlane.f32.xlu0 %v323
        %v325 = vpop.xlane.xlu0 %324
        %v326 = vsub.f32 %v317, %v322
        %v327 = vsub.f32 %v318, %v325
        %v328 = vmul.f32 %v326, 1.442695
        %v329 = vpow.pop %v328
        %v330 = vmul.f32 %v327, 1.442695
        %v331 = vpow.pop %v330
        %v332 = vsel %vm319, %v329, 0.0
        %333 = vadd.xlane.f32.xlu0 %v332
        %v334 = vpop.xlane.xlu0 %333
        %v335 = vsel %vm319, %v331, 0.0
        %336 = vadd.xlane.f32.xlu0 %v335
        %v337 = vpop.xlane.xlu0 %336
        %v338 = vrcp.pop %v334
        %v339 = vrcp.pop %v337
        %v340 = vmul.f32 %v329, %v338
        %v341 = vmul.f32 %v331, %v339
        %342 = vst.msk [vmem:[%s227] sm:$0xff] %vm319, %v340
        %343 = vst.msk [vmem:[%s227 + $0x8] sm:$0xff] %vm319, %v341
        %s344 = smul.u32 2, %s24
        %p345 = scmp.lt.s32.totalorder %s23, 1
        %s346 = scalar_select %p345, %s23, 1
        %p347 = scmp.lt.s32.totalorder %s344, 1
        %s348 = scalar_select %p347, %s344, 1
        %s349 = smul.addr %s346, 2
        %s350 = sadd.s32 %s348, %s349
        %s351 = smul.addr %s350, 8
        %s352 = scalar_lea.vmem %s2, %s351
        // Predicated region
        $region37: #{tpu_custom_call.1} parent=27 // pred_check
          %p353 = pneg %p105
        $region38: #{tpu_custom_call.1} parent=27 // pred_check_branch
          %355 = sbr.rel (%p353) target = $region40
        $region39: #{tpu_custom_call.1} parent=27 // pred_region
          %s356 = smul.u32 2, %s24
        $region40: #{tpu_custom_call.1} parent=27 // pred_fallthru
          _
      $region28: #{tpu_custom_call.1} parent=5 // pred_fallthru
        _
      %p357 = scmp.le.s32.totalorder 2, %s14
      // Predicated region
      $region41: #{tpu_custom_call.1} parent=5 // pred_check
        %p358 = pneg %p357
      $region42: #{tpu_custom_call.1} parent=5 // pred_check_branch
        %360 = sbr.rel (%p358) target = $region44
      $region43: #{tpu_custom_call.1} parent=5 // pred_region
        %s361 = ssub.s32 %s14, 2
        // Predicated region
        $region45: #{tpu_custom_call.1} parent=43 // pred_check
          %p362 = pneg %p111
        $region46: #{tpu_custom_call.1} parent=43 // pred_check_branch
          %364 = sbr.rel (%p362) target = $region48
        $region47: #{tpu_custom_call.1} parent=43 // pred_region
          %s365 = smul.u32 2, %s26
          %p366 = scmp.lt.s32.totalorder %s25, 1
          %s367 = scalar_select %p366, %s25, 1
          %p368 = scmp.lt.s32.totalorder %s365, 1
          %s369 = scalar_select %p368, %s365, 1
          %s370 = smul.addr %s367, 2
          %s371 = sadd.s32 %s369, %s370
          %s372 = smul.addr %s371, 8
          %s373 = scalar_lea.vmem %s2, %s372
        $region48: #{tpu_custom_call.1} parent=43 // pred_fallthru
          _
      $region44: #{tpu_custom_call.1} parent=5 // pred_fallthru
        _
    $region6: #{tpu_custom_call.1} parent=1 // loop_footer
      %s18 = sadd.s32 1, %s14
    $region7: #{tpu_custom_call.1} parent=1 // loop_footer_branch
      %13 = sbr.rel target = $region3
    $region8: #{tpu_custom_call.1} parent=1 // loop_exit
      _
    %374 = vsyncpa [#allocation3], 1
    %s375 = scalar_lea.sflag [#allocation3], 1
    %376 = vsyncpa %s375, 1
    %377 = vsyncpa [#allocation5], 1
    %s378 = scalar_lea.sflag [#allocation5], 1
    %379 = vsyncpa %s378, 1

</llo_original>
